<compile_context>
chip_gen: v6e
topology: v6e:2x2x1
jax: 0.10.0
libtpu: 0.0.40
codegen_flags: <defaults>
</compile_context>

<pallas_src>
import functools

import jax
import jax.numpy as jnp
from jax.experimental import pallas as pl
from jax.experimental.pallas import tpu as pltpu

IN_FEATURES = 10
HIDDEN = 10
OUT_FEATURES = 5

# TB cap: ~256 B/ batch column of double-buffered VMEM -> 32768 * 256 B ~= 8 MiB,
# safely under v5e's 16 MiB scoped default and v7x's 64 MiB physical VMEM while
# amortizing the ~0.35 us fixed per-grid-step overhead (~80% of HBM roofline).
_MAX_TB = 32768


def _round_up(n, m):
    return ((n + m - 1) // m) * m


def _pick_batch_tile(B, tb=None):
    """Lane-aligned (multiple-of-128) batch tile.

    - explicit tb: honor it (rounded to 128), capped at the padded batch.
    - small B (<= 256): one grid step -- pure launch-latency regime, nothing to
      pipeline, two tiny steps would be pure fixed overhead.
    - moderate B: split into (at least) 2 steps so the "parallel" grid axis can
      shard across both v7x TensorCores.
    - large B: cap at _MAX_TB to bound the double-buffered VMEM footprint.
    """
    if tb is not None:
        return max(128, min(_round_up(tb, 128), _round_up(B, 128)))
    if B <= 2 * 128:
        return _round_up(B, 128)
    if B <= _MAX_TB:
        return _round_up(pl.cdiv(B, 2), 128)
    # TODO(synk): for huge B on v7x, nudge TB so the step count is even (both TCs
    # stay busy on the last pair of steps); noise-level for B >> _MAX_TB.
    return _MAX_TB


def toy_model_kernel(x_ref, w1_ref, b1_ref, w2_ref, b2_ref, o_ref):
    # x_ref:  [10, TB]  (features x batch tile; lane axis = batch)
    # w1_ref: [10, 10]  ([out, in], PyTorch layout)
    # b1_ref: [10, 1]
    # w2_ref: [5, 10]
    # b2_ref: [5, 1]
    # o_ref:  [5, TB]
    x = x_ref[...]
    # net1: h^T = W1 @ x^T + b1   (column view of x @ W1^T + b1)
    h = jnp.dot(w1_ref[...], x, preferred_element_type=jnp.float32) + b1_ref[...]
    # ReLU
    h = jnp.maximum(h, 0.0)
    # net2: y^T = W2 @ h^T + b2
    y = jnp.dot(w2_ref[...], h, preferred_element_type=jnp.float32) + b2_ref[...]
    o_ref[...] = y.astype(o_ref.dtype)


def prepare_params(w1, b1, w2, b2):
    """One-time conversion to kernel layout (hoisted out of the forward path).

    Weights stay in PyTorch's [out, in] layout; biases become [out, 1] columns so
    they broadcast over the lane (batch) axis inside the kernel.
    """
    return w1, b1.reshape(-1, 1), w2, b2.reshape(-1, 1)


@functools.partial(jax.jit, static_argnames=("tb",))
def toy_model_forward_fm(x_t, w1, b1_col, w2, b2_col, *, tb=None):
    """Feature-major fast path (preferred): x_t [10, B] f32 -> y_t [5, B] f32.

    No wrapper transposes / pads: the only HBM traffic is the kernel's own
    streaming of x_t and y_t plus the tiny resident parameters.
    """
    B = x_t.shape[1]
    TB = _pick_batch_tile(B, tb)
    num_blocks = pl.cdiv(B, TB)  # ragged last block handled by Pallas

    cost = pl.CostEstimate(
        flops=2 * B * IN_FEATURES * HIDDEN + 2 * B * HIDDEN * OUT_FEATURES,
        transcendentals=0,
        bytes_accessed=4 * (B * (IN_FEATURES + OUT_FEATURES)
                            + HIDDEN * IN_FEATURES + HIDDEN
                            + OUT_FEATURES * HIDDEN + OUT_FEATURES),
    )

    y_t = pl.pallas_call(
        toy_model_kernel,
        out_shape=jax.ShapeDtypeStruct((OUT_FEATURES, B), jnp.float32),
        grid=(num_blocks,),
        in_specs=[
            pl.BlockSpec((IN_FEATURES, TB), lambda i: (0, i)),        # x^T (streams)
            pl.BlockSpec((HIDDEN, IN_FEATURES), lambda i: (0, 0)),    # W1 (resident)
            pl.BlockSpec((HIDDEN, 1), lambda i: (0, 0)),              # b1 (resident)
            pl.BlockSpec((OUT_FEATURES, HIDDEN), lambda i: (0, 0)),   # W2 (resident)
            pl.BlockSpec((OUT_FEATURES, 1), lambda i: (0, 0)),        # b2 (resident)
        ],
        out_specs=pl.BlockSpec((OUT_FEATURES, TB), lambda i: (0, i)),
        compiler_params=pltpu.CompilerParams(
            # Batch tiles are independent: shard across TensorCores (v7x megacore).
            dimension_semantics=("parallel",),
            # Headroom above v5e's 16 MiB scoped default; TB cap keeps us well
            # under v7x's 64 MiB physical VMEM.
            vmem_limit_bytes=32 * 1024 * 1024,
            # If a caller's producer is a transpose/cast of x, let XLA fuse it
            # into the pallas_call instead of materializing a standalone pass.
            allow_input_fusion=[True, False, False, False, False],
        ),
        cost_estimate=cost,
    )(x_t, w1, b1_col, w2, b2_col)

    return y_t


def toy_model_forward(x, w1, b1_col, w2, b2_col, *, tb=None):
    """PyTorch-layout compatibility wrapper: x [B, 10] -> y [B, 5].

    Note: the x.T / y.T here cost extra HBM passes; prefer keeping activations
    feature-major end-to-end and calling toy_model_forward_fm directly.
    """
    return toy_model_forward_fm(x.T, w1, b1_col, w2, b2_col, tb=tb).T


def init_params(key):
    """Deterministic init mirroring nn.Linear shapes: weight [out, in], bias [out]."""
    k1, k2, k3, k4 = jax.random.split(key, 4)
    bound1 = 1.0 / jnp.sqrt(10.0)
    bound2 = 1.0 / jnp.sqrt(10.0)
    w1 = jax.random.uniform(k1, (HIDDEN, IN_FEATURES), jnp.float32, -bound1, bound1)
    b1 = jax.random.uniform(k2, (HIDDEN,), jnp.float32, -bound1, bound1)
    w2 = jax.random.uniform(k3, (OUT_FEATURES, HIDDEN), jnp.float32, -bound2, bound2)
    b2 = jax.random.uniform(k4, (OUT_FEATURES,), jnp.float32, -bound2, bound2)
    return w1, b1, w2, b2


if __name__ == "__main__":
    key = jax.random.PRNGKey(0)
    kx, kp = jax.random.split(key)
    w1, b1, w2, b2 = init_params(kp)
    w1_k, b1_k, w2_k, b2_k = prepare_params(w1, b1, w2, b2)  # one-time param prep

    # Case 1: feature-major fast path, small batch -> single grid step
    # (latency regime). x is created already in [10, B] layout, simulating a
    # pipeline that keeps activations feature-major across ops.
    B1 = 256
    x1 = jax.random.normal(kx, (B1, IN_FEATURES), jnp.float32)
    x1_t = jnp.asarray(x1.T)                                  # [10, B1]
    y1_t = jax.block_until_ready(
        toy_model_forward_fm(x1_t, w1_k, b1_k, w2_k, b2_k))
    ref1 = jnp.maximum(x1 @ w1.T + b1, 0.0) @ w2.T + b2
    assert y1_t.shape == (OUT_FEATURES, B1)
    assert jnp.allclose(y1_t.T, ref1, atol=1e-5, rtol=1e-5)

    # Case 2: PyTorch-layout wrapper, ragged batch, forced multi-step grid
    # (exercises the pipelined batch axis + ragged last block with no jnp.pad).
    B2 = 300
    x2 = jax.random.normal(jax.random.PRNGKey(1), (B2, IN_FEATURES), jnp.float32)
    y2 = jax.block_until_ready(
        toy_model_forward(x2, w1_k, b1_k, w2_k, b2_k, tb=128))
    ref2 = jnp.maximum(x2 @ w1.T + b1, 0.0) @ w2.T + b2
    assert y2.shape == (B2, OUT_FEATURES)
    assert jnp.allclose(y2, ref2, atol=1e-5, rtol=1e-5)

    print("KERNEL_OK")
</pallas_src>

<mosaic_0001>
module attributes {stable_mosaic.version = 11 : i64} {
  func.func @toy_model_kernel(%arg0: i32, %arg1: memref<10x256xf32, #tpu.memory_space<vmem>>, %arg2: memref<10x10xf32, #tpu.memory_space<vmem>>, %arg3: memref<10x1xf32, #tpu.memory_space<vmem>>, %arg4: memref<5x10xf32, #tpu.memory_space<vmem>>, %arg5: memref<5x1xf32, #tpu.memory_space<vmem>>, %arg6: memref<5x256xf32, #tpu.memory_space<vmem>>) attributes {dimension_semantics = [#tpu.dimension_semantics<parallel>], iteration_bounds = array<i64: 1>, scalar_prefetch = 0 : i64, scratch_operands = 0 : i64, tpu.core_type = #tpu.core_type<tc>, window_params = [{transform_indices = @transform_0, window_bounds = array<i64: 10, 256>}, {pipeline_mode = #tpu.pipeline_mode<synchronous>, transform_indices = @transform_1, window_bounds = array<i64: 10, 10>}, {pipeline_mode = #tpu.pipeline_mode<synchronous>, transform_indices = @transform_2, window_bounds = array<i64: 10, 1>}, {pipeline_mode = #tpu.pipeline_mode<synchronous>, transform_indices = @transform_3, window_bounds = array<i64: 5, 10>}, {pipeline_mode = #tpu.pipeline_mode<synchronous>, transform_indices = @transform_4, window_bounds = array<i64: 5, 1>}, {transform_indices = @transform_5, window_bounds = array<i64: 5, 256>}]} {
    %c0 = arith.constant 0 : index
    %c0_0 = arith.constant 0 : index
    %0 = vector.load %arg1[%c0, %c0_0] : memref<10x256xf32, #tpu.memory_space<vmem>>, vector<10x256xf32>
    %c0_1 = arith.constant 0 : index
    %c0_2 = arith.constant 0 : index
    %1 = vector.load %arg2[%c0_1, %c0_2] : memref<10x10xf32, #tpu.memory_space<vmem>>, vector<10x10xf32>
    %cst = arith.constant dense<0.000000e+00> : vector<10x256xf32>
    %2 = tpu.matmul %1, %0, %cst {dimension_numbers = #tpu.dot_dimension_numbers<[1], [0], [0], [1], [0, 0, 1, 1], [], []>} : vector<10x10xf32>, vector<10x256xf32>, vector<10x256xf32> -> vector<10x256xf32>
    %c0_3 = arith.constant 0 : index
    %c0_4 = arith.constant 0 : index
    %3 = vector.load %arg3[%c0_3, %c0_4] : memref<10x1xf32, #tpu.memory_space<vmem>>, vector<10x1xf32>
    %4 = vector.broadcast %3 : vector<10x1xf32> to vector<10x256xf32>
    %5 = arith.addf %2, %4 : vector<10x256xf32>
    %cst_5 = arith.constant 0.000000e+00 : f32
    %6 = vector.broadcast %cst_5 : f32 to vector<10x256xf32>
    %7 = arith.maximumf %5, %6 : vector<10x256xf32>
    %c0_6 = arith.constant 0 : index
    %c0_7 = arith.constant 0 : index
    %8 = vector.load %arg4[%c0_6, %c0_7] : memref<5x10xf32, #tpu.memory_space<vmem>>, vector<5x10xf32>
    %cst_8 = arith.constant dense<0.000000e+00> : vector<5x256xf32>
    %9 = tpu.matmul %8, %7, %cst_8 {dimension_numbers = #tpu.dot_dimension_numbers<[1], [0], [0], [1], [0, 0, 1, 1], [], []>} : vector<5x10xf32>, vector<10x256xf32>, vector<5x256xf32> -> vector<5x256xf32>
    %c0_9 = arith.constant 0 : index
    %c0_10 = arith.constant 0 : index
    %10 = vector.load %arg5[%c0_9, %c0_10] : memref<5x1xf32, #tpu.memory_space<vmem>>, vector<5x1xf32>
    %11 = vector.broadcast %10 : vector<5x1xf32> to vector<5x256xf32>
    %12 = arith.addf %9, %11 : vector<5x256xf32>
    %c0_11 = arith.constant 0 : index
    %c0_12 = arith.constant 0 : index
    %13 = vector.load %arg6[%c0_11, %c0_12] : memref<5x256xf32, #tpu.memory_space<vmem>>, vector<5x256xf32>
    tpu.vector_store %arg6[%c0_11, %c0_12], %12 {strides = array<i32>} : memref<5x256xf32, #tpu.memory_space<vmem>>, vector<5x256xf32>,
    return
  }
  func.func @transform_0(%arg0: i32) -> (i32, i32) {
    %c0_i32 = arith.constant 0 : i32
    %c0_i32_0 = arith.constant 0 : i32
    return %c0_i32, %arg0 : i32, i32
  }
  func.func @transform_1(%arg0: i32) -> (i32, i32) {
    %c0_i32 = arith.constant 0 : i32
    %c0_i32_0 = arith.constant 0 : i32
    %c0_i32_1 = arith.constant 0 : i32
    return %c0_i32, %c0_i32_0 : i32, i32
  }
  func.func @transform_2(%arg0: i32) -> (i32, i32) {
    %c0_i32 = arith.constant 0 : i32
    %c0_i32_0 = arith.constant 0 : i32
    %c0_i32_1 = arith.constant 0 : i32
    return %c0_i32, %c0_i32_0 : i32, i32
  }
  func.func @transform_3(%arg0: i32) -> (i32, i32) {
    %c0_i32 = arith.constant 0 : i32
    %c0_i32_0 = arith.constant 0 : i32
    %c0_i32_1 = arith.constant 0 : i32
    return %c0_i32, %c0_i32_0 : i32, i32
  }
  func.func @transform_4(%arg0: i32) -> (i32, i32) {
    %c0_i32 = arith.constant 0 : i32
    %c0_i32_0 = arith.constant 0 : i32
    %c0_i32_1 = arith.constant 0 : i32
    return %c0_i32, %c0_i32_0 : i32, i32
  }
  func.func @transform_5(%arg0: i32) -> (i32, i32) {
    %c0_i32 = arith.constant 0 : i32
    %c0_i32_0 = arith.constant 0 : i32
    return %c0_i32, %arg0 : i32, i32
  }
}

</mosaic_0001>

<llo_original>
// kernel: toy_model_forward_fm.1
$region0: #{toy_model_forward_fm.1}
  #allocation0 [shape = 'u32[]', space=smem, size = 0x4, offset = 0x4, fixed_abs, tag = 'smem constant byte address 0x4 - core index']
  #allocation1 [shape = 'u32[144,128]{1,0:T(1,128)}', space=vmem, size = 0x12000, scoped, tag = 'internal scratch']
  %s0 = inlined_call_operand.hbm [shape: f32[10,256], index: 0, kind: input, shape index: {}]
  %s1 = inlined_call_operand.vmem [shape: f32[10,10], index: 1, kind: input, shape index: {}]
  %s2 = inlined_call_operand.vmem [shape: f32[10,1], index: 2, kind: input, shape index: {}]
  %s3 = inlined_call_operand.vmem [shape: f32[5,10], index: 3, kind: input, shape index: {}]
  %s4 = inlined_call_operand.vmem [shape: f32[5,1], index: 4, kind: input, shape index: {}]
  %s5 = inlined_call_operand.hbm [shape: f32[5,256], index: 5, kind: output, shape index: {}]
  %s6 = sld [smem:[#allocation0]]
  $region34: #{toy_model_forward_fm.1} parent=0
    _
  %s8 = ssub.s32 1, %s6
  %s9 = scalar_select 0, %s8, %s6
  $region1: #{toy_model_forward_fm.1} parent=0
    #allocation2 [shape = 'u8[16384]{0}', space=vmem, size = 0x4000, scoped, tag = 'input window, operand 0, single buffered']
    #allocation3 [shape = 's32[1]{0}', space=sflag, size = 0x4, scoped, tag = 'scoped memory for toy_model_forward_fm.1']
    #allocation4 [shape = 's32[1]{0}', space=sflag, size = 0x4, scoped, tag = 'scoped memory for toy_model_forward_fm.1']
    #allocation5 [shape = 'u8[8192]{0}', space=vmem, size = 0x2000, scoped, tag = 'output window, operand 0, single buffered']
    %10 = vsyncpa [#allocation3], 0
    %11 = vsyncpa [#allocation4], 0
    // Predicated region
    $region2: #{toy_model_forward_fm.1} parent=1 // pred_check
      _
    $region3: #{toy_model_forward_fm.1} parent=1 // pred_check_branch
      %13 = sbr.rel (0) target = $region5
    $region4: #{toy_model_forward_fm.1} parent=1 // pred_region
      %s15 = ssub.s32 512, 512
      %16 = vsyncadd [#allocation3], %s15
      %s17 = sshll.u32 [#allocation2], 4
      %s18 = int_to_ptr.vmem [resolvable:$true] %s17
      %23 = dma.hbm_to_vmem [thread:$0]  %s0, 512, %s18, [#allocation3], 256, 256, 16
    $region5: #{toy_model_forward_fm.1} parent=1 // pred_fallthru
      _
    // Predicated region
    $region6: #{toy_model_forward_fm.1} parent=1 // pred_check
      _
    $region7: #{toy_model_forward_fm.1} parent=1 // pred_check_branch
      %25 = sbr.rel (0) target = $region9
    $region8: #{toy_model_forward_fm.1} parent=1 // pred_region
      _
    $region9: #{toy_model_forward_fm.1} parent=1 // pred_fallthru
      _
    // Predicated region
    $region10: #{toy_model_forward_fm.1} parent=1 // pred_check
      _
    $region11: #{toy_model_forward_fm.1} parent=1 // pred_check_branch
      %27 = sbr.rel (0) target = $region13
    $region12: #{toy_model_forward_fm.1} parent=1 // pred_region
      _
    $region13: #{toy_model_forward_fm.1} parent=1 // pred_fallthru
      _
    // Predicated region
    $region14: #{toy_model_forward_fm.1} parent=1 // pred_check
      _
    $region15: #{toy_model_forward_fm.1} parent=1 // pred_check_branch
      %29 = sbr.rel (0) target = $region17
    $region16: #{toy_model_forward_fm.1} parent=1 // pred_region
      _
    $region17: #{toy_model_forward_fm.1} parent=1 // pred_fallthru
      _
    // Predicated region
    $region18: #{toy_model_forward_fm.1} parent=1 // pred_check
      _
    $region19: #{toy_model_forward_fm.1} parent=1 // pred_check_branch
      %31 = sbr.rel (0) target = $region21
    $region20: #{toy_model_forward_fm.1} parent=1 // pred_region
      _
    $region21: #{toy_model_forward_fm.1} parent=1 // pred_fallthru
      _
    // Predicated region
    $region22: #{toy_model_forward_fm.1} parent=1 // pred_check
      _
    $region23: #{toy_model_forward_fm.1} parent=1 // pred_check_branch
      %33 = sbr.rel (0) target = $region25
    $region24: #{toy_model_forward_fm.1} parent=1 // pred_region
      %34 = dma.done [#allocation3], 512
    $region25: #{toy_model_forward_fm.1} parent=1 // pred_fallthru
      _
    %v35 = vld [vmem:[#allocation2] sm:$0xff]
    %v36 = vld [vmem:[#allocation2 + $0x8] sm:$0xff]
    %v37 = vld [vmem:[#allocation2 + $0x10] sm:$0x3]
    %v38 = vld [vmem:[#allocation2 + $0x18] sm:$0x3]
    %v39 = vld [vmem:[%s1] sm:$0xff]
    %v40 = vld [vmem:[%s1 + $0x8] sm:$0x3]
    %v41 = vld [vmem:[%s2] sm:$0xff]
    %v42 = vld [vmem:[%s2 + $0x8] sm:$0x3]
    %44 = vset.pattern.permute.xlu0 0
    %45 = vperm.xlu0 %44, %v41
    %v46 = vpop.permute.xlu0 %45
    %49 = vset.pattern.permute.xlu0 0
    %50 = vperm.xlu0 %49, %v42
    %v51 = vpop.permute.xlu0 %50
    %vm53 = vcmask 80896
    %v55 = vsel %vm53, %v39, 0
    %v58 = vsel %vm53, %v40, 0
    %vm60 = vcmask 1041408
    %v62 = vsel %vm60, %v37, 0
    %v65 = vsel %vm60, %v38, 0
    %67 = vmatprep.subr.mxu0 0.0
    %68 = vmatpush1.msra.mxu0 0.0
    %69 = vmatprep.subr.mxu0 0.0
    %70 = vmatpush1.msra.mxu0 0.0
    %71 = vmatprep.subr.mxu0 0.0
    %72 = vmatpush1.msra.mxu0 0.0
    %73 = vmatprep.subr.mxu0 0.0
    %74 = vmatpush1.msra.mxu0 0.0
    %75 = vmatprep.subr.mxu0 0.0
    %76 = vmatpush1.msra.mxu0 0.0
    %77 = vmatprep.subr.mxu0 0.0
    %78 = vmatpush1.msra.mxu0 0.0
    %79 = vmatprep.subr.mxu0 0.0
    %80 = vmatpush1.msra.mxu0 0.0
    %81 = vmatprep.subr.mxu0 0.0
    %82 = vmatpush1.msra.mxu0 0.0
    %83 = vmatprep.subr.mxu0 0.0
    %84 = vmatpush1.msra.mxu0 0.0
    %85 = vmatprep.subr.mxu0 0.0
    %86 = vmatpush1.msra.mxu0 0.0
    %87 = vmatprep.subr.mxu0 0.0
    %88 = vmatpush1.msra.mxu0 0.0
    %89 = vmatprep.subr.mxu0 0.0
    %90 = vmatpush1.msra.mxu0 0.0
    %91 = vmatprep.subr.mxu0 0.0
    %92 = vmatpush1.msra.mxu0 0.0
    %93 = vmatprep.subr.mxu0 0.0
    %94 = vmatpush1.msra.mxu0 0.0
    %95 = vmatprep.subr.mxu0 %v65
    %96 = vmatpush1.msra.mxu0 %v62
    %97 = vmatprep.subr.mxu0 %v36
    %98 = vmatpush1.msra.mxu0 %v35
    %99 = vmatprep.subr.mxu0 0.0
    %100 = vmatpush2.msra.mxu0 0.0
    %101 = vmatprep.subr.mxu0 0.0
    %102 = vmatpush2.msra.mxu0 0.0
    %103 = vmatprep.subr.mxu0 0.0
    %104 = vmatpush2.msra.mxu0 0.0
    %105 = vmatprep.subr.mxu0 0.0
    %106 = vmatpush2.msra.mxu0 0.0
    %107 = vmatprep.subr.mxu0 0.0
    %108 = vmatpush2.msra.mxu0 0.0
    %109 = vmatprep.subr.mxu0 0.0
    %110 = vmatpush2.msra.mxu0 0.0
    %111 = vmatprep.subr.mxu0 0.0
    %112 = vmatpush2.msra.mxu0 0.0
    %113 = vmatprep.subr.mxu0 0.0
    %114 = vmatpush2.msra.mxu0 0.0
    %115 = vmatprep.subr.mxu0 0.0
    %116 = vmatpush2.msra.mxu0 0.0
    %117 = vmatprep.subr.mxu0 0.0
    %118 = vmatpush2.msra.mxu0 0.0
    %119 = vmatprep.subr.mxu0 0.0
    %120 = vmatpush2.msra.mxu0 0.0
    %121 = vmatprep.subr.mxu0 0.0
    %122 = vmatpush2.msra.mxu0 0.0
    %123 = vmatprep.subr.mxu0 0.0
    %124 = vmatpush2.msra.mxu0 0.0
    %125 = vmatprep.subr.mxu0 0.0
    %126 = vmatpush2.msra.mxu0 0.0
    %127 = vmatprep.subr.mxu0 0.0
    %128 = vmatpush2.msra.mxu0 0.0
    %129 = vmatprep.subr.mxu0 0.0
    %130 = vmatpush2.msra.mxu0 0.0
    %131 = vmatprep.mubr.f32.mxu0 0.0
    %132 = vmatmul.mubr.f32.gmra.mxu0 %v55
    %v133 = vpop.f32.mrf.mxu0
    %v134 = vadd.f32 %v46, %v133
    %v135 = vpop.f32.mrf.mxu0
    %v136 = vadd.f32 %v46, %v135
    %137 = vmatprep.mubr.f32.mxu0 0.0
    %138 = vmatmul.mubr.f32.gmra.mxu0 %v58
    %v139 = vpop.f32.mrf.mxu0
    %v140 = vadd.f32 %v51, %v139
    %v141 = vpop.f32.mrf.mxu0
    %v142 = vadd.f32 %v51, %v141
    %143 = vdwg.mxu0
    %v144 = vmax.f32 %v134, 0.0
    %v145 = vmax.f32 %v136, 0.0
    %v146 = vmax.f32 %v140, 0.0
    %v147 = vmax.f32 %v142, 0.0
    %v148 = vld [vmem:[%s3] sm:$0x1f]
    %v149 = vld [vmem:[%s4] sm:$0x1f]
    %151 = vset.pattern.permute.xlu0 0
    %152 = vperm.xlu0 %151, %v149
    %v153 = vpop.permute.xlu0 %152
    %v156 = vsel %vm53, %v148, 0
    %v159 = vsel %vm60, %v146, 0
    %v162 = vsel %vm60, %v147, 0
    %164 = vmatprep.subr.mxu0 0.0
    %165 = vmatpush1.msra.mxu0 0.0
    %166 = vmatprep.subr.mxu0 0.0
    %167 = vmatpush1.msra.mxu0 0.0
    %168 = vmatprep.subr.mxu0 0.0
    %169 = vmatpush1.msra.mxu0 0.0
    %170 = vmatprep.subr.mxu0 0.0
    %171 = vmatpush1.msra.mxu0 0.0
    %172 = vmatprep.subr.mxu0 0.0
    %173 = vmatpush1.msra.mxu0 0.0
    %174 = vmatprep.subr.mxu0 0.0
    %175 = vmatpush1.msra.mxu0 0.0
    %176 = vmatprep.subr.mxu0 0.0
    %177 = vmatpush1.msra.mxu0 0.0
    %178 = vmatprep.subr.mxu0 0.0
    %179 = vmatpush1.msra.mxu0 0.0
    %180 = vmatprep.subr.mxu0 0.0
    %181 = vmatpush1.msra.mxu0 0.0
    %182 = vmatprep.subr.mxu0 0.0
    %183 = vmatpush1.msra.mxu0 0.0
    %184 = vmatprep.subr.mxu0 0.0
    %185 = vmatpush1.msra.mxu0 0.0
    %186 = vmatprep.subr.mxu0 0.0
    %187 = vmatpush1.msra.mxu0 0.0
    %188 = vmatprep.subr.mxu0 0.0
    %189 = vmatpush1.msra.mxu0 0.0
    %190 = vmatprep.subr.mxu0 0.0
    %191 = vmatpush1.msra.mxu0 0.0
    %192 = vmatprep.subr.mxu0 %v162
    %193 = vmatpush1.msra.mxu0 %v159
    %194 = vmatprep.subr.mxu0 %v145
    %195 = vmatpush1.msra.mxu0 %v144
    %196 = vmatprep.subr.mxu0 0.0
    %197 = vmatpush2.msra.mxu0 0.0
    %198 = vmatprep.subr.mxu0 0.0
    %199 = vmatpush2.msra.mxu0 0.0
    %200 = vmatprep.subr.mxu0 0.0
    %201 = vmatpush2.msra.mxu0 0.0
    %202 = vmatprep.subr.mxu0 0.0
    %203 = vmatpush2.msra.mxu0 0.0
    %204 = vmatprep.subr.mxu0 0.0
    %205 = vmatpush2.msra.mxu0 0.0
    %206 = vmatprep.subr.mxu0 0.0
    %207 = vmatpush2.msra.mxu0 0.0
    %208 = vmatprep.subr.mxu0 0.0
    %209 = vmatpush2.msra.mxu0 0.0
    %210 = vmatprep.subr.mxu0 0.0
    %211 = vmatpush2.msra.mxu0 0.0
    %212 = vmatprep.subr.mxu0 0.0
    %213 = vmatpush2.msra.mxu0 0.0
    %214 = vmatprep.subr.mxu0 0.0
    %215 = vmatpush2.msra.mxu0 0.0
    %216 = vmatprep.subr.mxu0 0.0
    %217 = vmatpush2.msra.mxu0 0.0
    %218 = vmatprep.subr.mxu0 0.0
    %219 = vmatpush2.msra.mxu0 0.0
    %220 = vmatprep.subr.mxu0 0.0
    %221 = vmatpush2.msra.mxu0 0.0
    %222 = vmatprep.subr.mxu0 0.0
    %223 = vmatpush2.msra.mxu0 0.0
    %224 = vmatprep.subr.mxu0 0.0
    %225 = vmatpush2.msra.mxu0 0.0
    %226 = vmatprep.subr.mxu0 0.0
    %227 = vmatpush2.msra.mxu0 0.0
    %228 = vmatprep.mubr.f32.mxu0 0.0
    %229 = vmatmul.mubr.f32.gmra.mxu0 %v156
    %v230 = vpop.f32.mrf.mxu0
    %v231 = vadd.f32 %v153, %v230
    %v232 = vpop.f32.mrf.mxu0
    %v233 = vadd.f32 %v153, %v232
    %234 = vdwg.mxu0
    %235 = vst [vmem:[#allocation5] sm:$0x1f] %v231
    %236 = vst [vmem:[#allocation5 + $0x8] sm:$0x1f] %v233
    // Predicated region
    $region26: #{toy_model_forward_fm.1} parent=1 // pred_check
      _
    $region27: #{toy_model_forward_fm.1} parent=1 // pred_check_branch
      %238 = sbr.rel (0) target = $region29
    $region28: #{toy_model_forward_fm.1} parent=1 // pred_region
      %s240 = ssub.s32 256, 256
      %241 = vsyncadd [#allocation4], %s240
      %s243 = sshll.u32 [#allocation5], 4
      %s244 = int_to_ptr.vmem [resolvable:$true] %s243
      %246 = dma.vmem_to_hbm [thread:$0]  %s244, 256, %s5, [#allocation4]
    $region29: #{toy_model_forward_fm.1} parent=1 // pred_fallthru
      _
    // Predicated region
    $region30: #{toy_model_forward_fm.1} parent=1 // pred_check
      _
    $region31: #{toy_model_forward_fm.1} parent=1 // pred_check_branch
      %248 = sbr.rel (0) target = $region33
    $region32: #{toy_model_forward_fm.1} parent=1 // pred_region
      %249 = dma.done [#allocation4], 256
    $region33: #{toy_model_forward_fm.1} parent=1 // pred_fallthru
      _
    %250 = vsyncpa [#allocation3], 1
    %251 = vsyncpa [#allocation4], 1

</llo_original>
